<compile_context>
chip_gen: v5e
topology: v5e:2x2
jax: 0.10.0
libtpu: 0.0.40
codegen_flags: <defaults>
</compile_context>

<pallas_src>
import functools

import jax
import jax.numpy as jnp
from jax.experimental import pallas as pl
from jax.experimental.pallas import tpu as pltpu


def _attn_kernel(q_ref, k_ref, v_ref, wq_ref, wk_ref, wv_ref, wp_ref, bp_ref,
                 o_ref, kp_ref, vp_ref, *, num_heads):
    cdt = q_ref.dtype                 # MXU operand dtype (bf16 stays bf16)

    # K/V projections once per batch element: recomputed only on the first
    # query tile, then reused from VMEM scratch for the remaining tiles.
    @pl.when(pl.program_id(1) == 0)
    def _():
        kp_ref[...] = jnp.dot(k_ref[0], wk_ref[...],
                              preferred_element_type=jnp.float32).astype(cdt)
        vp_ref[...] = jnp.dot(v_ref[0], wv_ref[...],
                              preferred_element_type=jnp.float32).astype(cdt)

    # Per-tile Q projection (qkv_bias=False).  qk scale is folded into Wq.T by
    # the wrapper.  Native-dtype operands, f32 accumulation.
    q = jnp.dot(q_ref[0], wq_ref[...],
                preferred_element_type=jnp.float32).astype(cdt)   # (TQ,  C)
    k = kp_ref[...]                                               # (Nkv, C)
    v = vp_ref[...]                                               # (Nkv, C)

    tq, C = q.shape
    hd = C // num_heads

    # Per-head attention.  Head outputs are concatenated so the output
    # projection is ONE full-K (tq,C)@(C,C) matmul instead of num_heads
    # skinny (K=hd) matmuls chained through a serial accumulator.
    head_outs = []
    for h in range(num_heads):        # static unroll over heads
        qh = q[:, h * hd:(h + 1) * hd]        # (tq,  hd)
        kh = k[:, h * hd:(h + 1) * hd]        # (Nkv, hd)
        vh = v[:, h * hd:(h + 1) * hd]        # (Nkv, hd)

        # q_h @ k_h^T without materializing a transposed (hd, Nkv) tile.
        s = jax.lax.dot_general(qh, kh, (((1,), (1,)), ((), ())),
                                preferred_element_type=jnp.float32)   # (tq, Nkv) f32
        m = jnp.max(s, axis=-1, keepdims=True)
        p = jnp.exp(s - m)                                            # f32, <= 1
        # Normalize AFTER the (linear) PV matmul: the scale touches (tq, hd)
        # instead of (tq, Nkv) and the divide becomes an EUP reciprocal.
        r = pl.reciprocal(jnp.sum(p, axis=-1, keepdims=True), approx=True)
        oh = jnp.dot(p.astype(cdt), vh, preferred_element_type=jnp.float32) * r
        head_outs.append(oh)
        # attn_drop / proj_drop are identity (p=0.0 / eval mode)

    o_all = jnp.concatenate(head_outs, axis=-1)                       # (tq, C) f32
    out = jnp.dot(o_all.astype(cdt), wp_ref[...],
                  preferred_element_type=jnp.float32)                 # (tq, C) f32
    out = out + bp_ref[...].astype(jnp.float32)
    o_ref[0] = out.astype(o_ref.dtype)


def softmax_cross_attention(query, key, value, params, num_heads, *, tq=None):
    """Pallas implementation of SoftmaxCrossAttention.forward (sr_ratio=1)."""
    B, N, C = query.shape
    _, Nkv, _ = key.shape
    hd = C // num_heads
    scale = hd ** (-0.5)
    wq_t, wk_t, wv_t, wp_t, bp = params

    # Fold the qk scale into the Q projection weight (free at runtime).
    wq_s = (wq_t * scale).astype(wq_t.dtype)

    # Query-row tile size: multiple of 8 (sublane) or the full N extent.
    if tq is None:
        tq = N if N <= 256 else 256
    assert N % tq == 0 and (tq % 8 == 0 or tq == N), (N, tq)

    kernel = functools.partial(_attn_kernel, num_heads=num_heads)

    # Explicit VMEM budget: double-buffered q/out tiles + k/v blocks, resident
    # weights + bias, cached projected K/V scratch, f32 intermediates —
    # generous headroom, capped at v7x's 64 MiB.
    itemsize = jnp.dtype(query.dtype).itemsize
    vmem_est = (2 * (2 * tq * C + 2 * Nkv * C) * itemsize      # pipelined blocks
                + 4 * C * C * itemsize + C * itemsize          # weights + bias
                + 2 * Nkv * C * itemsize                       # K/V proj scratch
                + (tq * Nkv + 2 * tq * C + 2 * Nkv * C) * 4)   # f32 intermediates
    vmem_limit = int(min(max(4 * vmem_est, 32 << 20), 64 << 20))

    grid_spec = pltpu.PrefetchScalarGridSpec(
        num_scalar_prefetch=0,
        grid=(B, N // tq),
        in_specs=[
            pl.BlockSpec((1, tq, C),  lambda b, t: (b, t, 0)),   # query tile
            pl.BlockSpec((1, Nkv, C), lambda b, t: (b, 0, 0)),   # key   (resident over t)
            pl.BlockSpec((1, Nkv, C), lambda b, t: (b, 0, 0)),   # value (resident over t)
            pl.BlockSpec((C, C),      lambda b, t: (0, 0)),      # Wq.T * scale
            pl.BlockSpec((C, C),      lambda b, t: (0, 0)),      # Wk.T
            pl.BlockSpec((C, C),      lambda b, t: (0, 0)),      # Wv.T
            pl.BlockSpec((C, C),      lambda b, t: (0, 0)),      # Wproj.T
            pl.BlockSpec((1, C),      lambda b, t: (0, 0)),      # proj bias
        ],
        out_specs=pl.BlockSpec((1, tq, C), lambda b, t: (b, t, 0)),
        scratch_shapes=[
            pltpu.VMEM((Nkv, C), query.dtype),   # projected K (cached per batch)
            pltpu.VMEM((Nkv, C), query.dtype),   # projected V (cached per batch)
        ],
    )

    return pl.pallas_call(
        kernel,
        out_shape=jax.ShapeDtypeStruct((B, N, C), query.dtype),
        grid_spec=grid_spec,
        compiler_params=pltpu.CompilerParams(
            # Tile axis carries the cached-K/V dependency -> "arbitrary".
            dimension_semantics=("parallel", "arbitrary"),
            vmem_limit_bytes=vmem_limit),
    )(query, key, value, wq_s, wk_t, wv_t, wp_t, bp)


def reference(query, key, value, params, num_heads):
    """Pure-JAX mirror of the PyTorch forward (sr_ratio=1)."""
    wq_t, wk_t, wv_t, wp_t, bp = params
    B, N, C = query.shape
    hd = C // num_heads
    scale = hd ** (-0.5)
    q = (query @ wq_t).reshape(B, N, num_heads, hd).transpose(0, 2, 1, 3)
    k = (key @ wk_t).reshape(B, -1, num_heads, hd).transpose(0, 2, 1, 3)
    v = (value @ wv_t).reshape(B, -1, num_heads, hd).transpose(0, 2, 1, 3)
    attn = jax.nn.softmax(jnp.einsum('bhqd,bhkd->bhqk', q, k) * scale, axis=-1)
    x = jnp.einsum('bhqk,bhkd->bhqd', attn, v).transpose(0, 2, 1, 3).reshape(B, N, C)
    return x @ wp_t + bp


if __name__ == "__main__":
    # Small shapes consistent with the module's forward signature.
    B, N, Nkv, C, num_heads = 2, 16, 8, 32, 4      # dim % num_heads == 0
    H, W = 2, 4                                    # unused when sr_ratio == 1

    key0 = jax.random.PRNGKey(0)
    ks = jax.random.split(key0, 8)
    query = jax.random.normal(ks[0], (B, N, C), jnp.float32)
    keyt  = jax.random.normal(ks[1], (B, Nkv, C), jnp.float32)
    value = jax.random.normal(ks[2], (B, Nkv, C), jnp.float32)

    # Deterministic parameter init (stored as W.T so kernel does x @ w).
    wq_t = 0.05 * jax.random.normal(ks[3], (C, C), jnp.float32)
    wk_t = 0.05 * jax.random.normal(ks[4], (C, C), jnp.float32)
    wv_t = 0.05 * jax.random.normal(ks[5], (C, C), jnp.float32)
    wp_t = 0.05 * jax.random.normal(ks[6], (C, C), jnp.float32)
    bp   = 0.05 * jax.random.normal(ks[7], (1, C), jnp.float32)
    params = (wq_t, wk_t, wv_t, wp_t, bp)

    # tq=8 exercises the query-tile grid axis (grid = (B, N // tq) = (2, 2))
    # and the per-batch K/V projection cache.
    out = softmax_cross_attention(query, keyt, value, params, num_heads, tq=8)
    out = jax.block_until_ready(out)

    ref = reference(query, keyt, value, params, num_heads)
    assert out.shape == (B, N, C)
    # Tolerance accommodates the EUP approximate reciprocal in the softmax
    # normalization (everything else matches the reference bit-for-bit-ish).
    assert jnp.allclose(out, ref, atol=2e-3, rtol=2e-3), \
        f"max abs err {jnp.max(jnp.abs(out - ref))}"

    print("KERNEL_OK")
</pallas_src>

<mosaic_0001>
module attributes {stable_mosaic.version = 11 : i64} {
  func.func @_attn_kernel(%arg0: i32, %arg1: i32, %arg2: memref<1x8x32xf32, #tpu.memory_space<vmem>>, %arg3: memref<1x8x32xf32, #tpu.memory_space<vmem>>, %arg4: memref<1x8x32xf32, #tpu.memory_space<vmem>>, %arg5: memref<32x32xf32, #tpu.memory_space<vmem>>, %arg6: memref<32x32xf32, #tpu.memory_space<vmem>>, %arg7: memref<32x32xf32, #tpu.memory_space<vmem>>, %arg8: memref<32x32xf32, #tpu.memory_space<vmem>>, %arg9: memref<1x32xf32, #tpu.memory_space<vmem>>, %arg10: memref<1x8x32xf32, #tpu.memory_space<vmem>>, %arg11: memref<8x32xf32, #tpu.memory_space<vmem>>, %arg12: memref<8x32xf32, #tpu.memory_space<vmem>>) attributes {dimension_semantics = [#tpu.dimension_semantics<parallel>, #tpu.dimension_semantics<arbitrary>], iteration_bounds = array<i64: 2, 2>, scalar_prefetch = 0 : i64, scratch_operands = 2 : i64, tpu.core_type = #tpu.core_type<tc>, window_params = [{transform_indices = @transform_0, window_bounds = array<i64: 1, 8, 32>}, {transform_indices = @transform_1, window_bounds = array<i64: 1, 8, 32>}, {transform_indices = @transform_2, window_bounds = array<i64: 1, 8, 32>}, {pipeline_mode = #tpu.pipeline_mode<synchronous>, transform_indices = @transform_3, window_bounds = array<i64: 32, 32>}, {pipeline_mode = #tpu.pipeline_mode<synchronous>, transform_indices = @transform_4, window_bounds = array<i64: 32, 32>}, {pipeline_mode = #tpu.pipeline_mode<synchronous>, transform_indices = @transform_5, window_bounds = array<i64: 32, 32>}, {pipeline_mode = #tpu.pipeline_mode<synchronous>, transform_indices = @transform_6, window_bounds = array<i64: 32, 32>}, {pipeline_mode = #tpu.pipeline_mode<synchronous>, transform_indices = @transform_7, window_bounds = array<i64: 1, 32>}, {transform_indices = @transform_8, window_bounds = array<i64: 1, 8, 32>}]} {
    %c0_i32 = arith.constant 0 : i32
    %0 = arith.cmpi eq, %arg1, %c0_i32 : i32
    %1 = arith.extui %0 : i1 to i32
    %c0_i32_0 = arith.constant 0 : i32
    %2 = arith.cmpi ne, %1, %c0_i32_0 : i32
    scf.if %2 {
      %c0_33 = arith.constant 0 : index
      %c0_34 = arith.constant 0 : index
      %c0_35 = arith.constant 0 : index
      %78 = vector.load %arg3[%c0_33, %c0_34, %c0_35] : memref<1x8x32xf32, #tpu.memory_space<vmem>>, vector<1x8x32xf32>
      %79 = vector.shape_cast %78 : vector<1x8x32xf32> to vector<8x32xf32>
      %c0_36 = arith.constant 0 : index
      %c0_37 = arith.constant 0 : index
      %80 = vector.load %arg6[%c0_36, %c0_37] : memref<32x32xf32, #tpu.memory_space<vmem>>, vector<32x32xf32>
      %cst_38 = arith.constant dense<0.000000e+00> : vector<8x32xf32>
      %81 = tpu.matmul %79, %80, %cst_38 {dimension_numbers = #tpu.dot_dimension_numbers<[1], [0], [0], [1], [0, 0, 1, 1], [], []>} : vector<8x32xf32>, vector<32x32xf32>, vector<8x32xf32> -> vector<8x32xf32>
      %c0_39 = arith.constant 0 : index
      %c0_40 = arith.constant 0 : index
      %82 = vector.load %arg11[%c0_39, %c0_40] : memref<8x32xf32, #tpu.memory_space<vmem>>, vector<8x32xf32>
      tpu.vector_store %arg11[%c0_39, %c0_40], %81 {strides = array<i32>} : memref<8x32xf32, #tpu.memory_space<vmem>>, vector<8x32xf32>,
      %c0_41 = arith.constant 0 : index
      %c0_42 = arith.constant 0 : index
      %c0_43 = arith.constant 0 : index
      %83 = vector.load %arg4[%c0_41, %c0_42, %c0_43] : memref<1x8x32xf32, #tpu.memory_space<vmem>>, vector<1x8x32xf32>
      %84 = vector.shape_cast %83 : vector<1x8x32xf32> to vector<8x32xf32>
      %c0_44 = arith.constant 0 : index
      %c0_45 = arith.constant 0 : index
      %85 = vector.load %arg7[%c0_44, %c0_45] : memref<32x32xf32, #tpu.memory_space<vmem>>, vector<32x32xf32>
      %cst_46 = arith.constant dense<0.000000e+00> : vector<8x32xf32>
      %86 = tpu.matmul %84, %85, %cst_46 {dimension_numbers = #tpu.dot_dimension_numbers<[1], [0], [0], [1], [0, 0, 1, 1], [], []>} : vector<8x32xf32>, vector<32x32xf32>, vector<8x32xf32> -> vector<8x32xf32>
      %c0_47 = arith.constant 0 : index
      %c0_48 = arith.constant 0 : index
      %87 = vector.load %arg12[%c0_47, %c0_48] : memref<8x32xf32, #tpu.memory_space<vmem>>, vector<8x32xf32>
      tpu.vector_store %arg12[%c0_47, %c0_48], %86 {strides = array<i32>} : memref<8x32xf32, #tpu.memory_space<vmem>>, vector<8x32xf32>,
    } else {
    }
    %c0 = arith.constant 0 : index
    %c0_1 = arith.constant 0 : index
    %c0_2 = arith.constant 0 : index
    %3 = vector.load %arg2[%c0, %c0_1, %c0_2] : memref<1x8x32xf32, #tpu.memory_space<vmem>>, vector<1x8x32xf32>
    %4 = vector.shape_cast %3 : vector<1x8x32xf32> to vector<8x32xf32>
    %c0_3 = arith.constant 0 : index
    %c0_4 = arith.constant 0 : index
    %5 = vector.load %arg5[%c0_3, %c0_4] : memref<32x32xf32, #tpu.memory_space<vmem>>, vector<32x32xf32>
    %cst = arith.constant dense<0.000000e+00> : vector<8x32xf32>
    %6 = tpu.matmul %4, %5, %cst {dimension_numbers = #tpu.dot_dimension_numbers<[1], [0], [0], [1], [0, 0, 1, 1], [], []>} : vector<8x32xf32>, vector<32x32xf32>, vector<8x32xf32> -> vector<8x32xf32>
    %c0_5 = arith.constant 0 : index
    %c0_6 = arith.constant 0 : index
    %7 = vector.load %arg11[%c0_5, %c0_6] : memref<8x32xf32, #tpu.memory_space<vmem>>, vector<8x32xf32>
    %c0_7 = arith.constant 0 : index
    %c0_8 = arith.constant 0 : index
    %8 = vector.load %arg12[%c0_7, %c0_8] : memref<8x32xf32, #tpu.memory_space<vmem>>, vector<8x32xf32>
    %9 = vector.extract_strided_slice %6 {offsets = [0, 0], sizes = [8, 8], strides = [1, 1]} : vector<8x32xf32> to vector<8x8xf32>
    %10 = vector.extract_strided_slice %7 {offsets = [0, 0], sizes = [8, 8], strides = [1, 1]} : vector<8x32xf32> to vector<8x8xf32>
    %11 = vector.extract_strided_slice %8 {offsets = [0, 0], sizes = [8, 8], strides = [1, 1]} : vector<8x32xf32> to vector<8x8xf32>
    %cst_9 = arith.constant dense<0.000000e+00> : vector<8x8xf32>
    %12 = tpu.matmul %9, %10, %cst_9 {dimension_numbers = #tpu.dot_dimension_numbers<[1], [1], [0], [0], [0, 0, 1, 0], [], []>} : vector<8x8xf32>, vector<8x8xf32>, vector<8x8xf32> -> vector<8x8xf32>
    %cst_10 = arith.constant dense<0xFF800000> : vector<8xf32>
    %13 = vector.multi_reduction <maximumf>, %12, %cst_10 [1] : vector<8x8xf32> to vector<8xf32>
    %14 = vector.shape_cast %13 : vector<8xf32> to vector<8x1xf32>
    %15 = vector.broadcast %14 : vector<8x1xf32> to vector<8x8xf32>
    %16 = arith.subf %12, %15 : vector<8x8xf32>
    %17 = math.exp %16 : vector<8x8xf32>
    %cst_11 = arith.constant dense<0.000000e+00> : vector<8xf32>
    %18 = vector.multi_reduction <add>, %17, %cst_11 [1] : vector<8x8xf32> to vector<8xf32>
    %19 = vector.shape_cast %18 : vector<8xf32> to vector<8x1xf32>
    %20 = tpu.reciprocal %19 {approx = true} : vector<8x1xf32> -> vector<8x1xf32>
    %cst_12 = arith.constant dense<0.000000e+00> : vector<8x8xf32>
    %21 = tpu.matmul %17, %11, %cst_12 {dimension_numbers = #tpu.dot_dimension_numbers<[1], [0], [0], [1], [0, 0, 1, 1], [], []>} : vector<8x8xf32>, vector<8x8xf32>, vector<8x8xf32> -> vector<8x8xf32>
    %22 = vector.broadcast %20 : vector<8x1xf32> to vector<8x8xf32>
    %23 = arith.mulf %21, %22 : vector<8x8xf32>
    %24 = vector.extract_strided_slice %6 {offsets = [0, 8], sizes = [8, 8], strides = [1, 1]} : vector<8x32xf32> to vector<8x8xf32>
    %25 = vector.extract_strided_slice %7 {offsets = [0, 8], sizes = [8, 8], strides = [1, 1]} : vector<8x32xf32> to vector<8x8xf32>
    %26 = vector.extract_strided_slice %8 {offsets = [0, 8], sizes = [8, 8], strides = [1, 1]} : vector<8x32xf32> to vector<8x8xf32>
    %cst_13 = arith.constant dense<0.000000e+00> : vector<8x8xf32>
    %27 = tpu.matmul %24, %25, %cst_13 {dimension_numbers = #tpu.dot_dimension_numbers<[1], [1], [0], [0], [0, 0, 1, 0], [], []>} : vector<8x8xf32>, vector<8x8xf32>, vector<8x8xf32> -> vector<8x8xf32>
    %cst_14 = arith.constant dense<0xFF800000> : vector<8xf32>
    %28 = vector.multi_reduction <maximumf>, %27, %cst_14 [1] : vector<8x8xf32> to vector<8xf32>
    %29 = vector.shape_cast %28 : vector<8xf32> to vector<8x1xf32>
    %30 = vector.broadcast %29 : vector<8x1xf32> to vector<8x8xf32>
    %31 = arith.subf %27, %30 : vector<8x8xf32>
    %32 = math.exp %31 : vector<8x8xf32>
    %cst_15 = arith.constant dense<0.000000e+00> : vector<8xf32>
    %33 = vector.multi_reduction <add>, %32, %cst_15 [1] : vector<8x8xf32> to vector<8xf32>
    %34 = vector.shape_cast %33 : vector<8xf32> to vector<8x1xf32>
    %35 = tpu.reciprocal %34 {approx = true} : vector<8x1xf32> -> vector<8x1xf32>
    %cst_16 = arith.constant dense<0.000000e+00> : vector<8x8xf32>
    %36 = tpu.matmul %32, %26, %cst_16 {dimension_numbers = #tpu.dot_dimension_numbers<[1], [0], [0], [1], [0, 0, 1, 1], [], []>} : vector<8x8xf32>, vector<8x8xf32>, vector<8x8xf32> -> vector<8x8xf32>
    %37 = vector.broadcast %35 : vector<8x1xf32> to vector<8x8xf32>
    %38 = arith.mulf %36, %37 : vector<8x8xf32>
    %39 = vector.extract_strided_slice %6 {offsets = [0, 16], sizes = [8, 8], strides = [1, 1]} : vector<8x32xf32> to vector<8x8xf32>
    %40 = vector.extract_strided_slice %7 {offsets = [0, 16], sizes = [8, 8], strides = [1, 1]} : vector<8x32xf32> to vector<8x8xf32>
    %41 = vector.extract_strided_slice %8 {offsets = [0, 16], sizes = [8, 8], strides = [1, 1]} : vector<8x32xf32> to vector<8x8xf32>
    %cst_17 = arith.constant dense<0.000000e+00> : vector<8x8xf32>
    %42 = tpu.matmul %39, %40, %cst_17 {dimension_numbers = #tpu.dot_dimension_numbers<[1], [1], [0], [0], [0, 0, 1, 0], [], []>} : vector<8x8xf32>, vector<8x8xf32>, vector<8x8xf32> -> vector<8x8xf32>
    %cst_18 = arith.constant dense<0xFF800000> : vector<8xf32>
    %43 = vector.multi_reduction <maximumf>, %42, %cst_18 [1] : vector<8x8xf32> to vector<8xf32>
    %44 = vector.shape_cast %43 : vector<8xf32> to vector<8x1xf32>
    %45 = vector.broadcast %44 : vector<8x1xf32> to vector<8x8xf32>
    %46 = arith.subf %42, %45 : vector<8x8xf32>
    %47 = math.exp %46 : vector<8x8xf32>
    %cst_19 = arith.constant dense<0.000000e+00> : vector<8xf32>
    %48 = vector.multi_reduction <add>, %47, %cst_19 [1] : vector<8x8xf32> to vector<8xf32>
    %49 = vector.shape_cast %48 : vector<8xf32> to vector<8x1xf32>
    %50 = tpu.reciprocal %49 {approx = true} : vector<8x1xf32> -> vector<8x1xf32>
    %cst_20 = arith.constant dense<0.000000e+00> : vector<8x8xf32>
    %51 = tpu.matmul %47, %41, %cst_20 {dimension_numbers = #tpu.dot_dimension_numbers<[1], [0], [0], [1], [0, 0, 1, 1], [], []>} : vector<8x8xf32>, vector<8x8xf32>, vector<8x8xf32> -> vector<8x8xf32>
    %52 = vector.broadcast %50 : vector<8x1xf32> to vector<8x8xf32>
    %53 = arith.mulf %51, %52 : vector<8x8xf32>
    %54 = vector.extract_strided_slice %6 {offsets = [0, 24], sizes = [8, 8], strides = [1, 1]} : vector<8x32xf32> to vector<8x8xf32>
    %55 = vector.extract_strided_slice %7 {offsets = [0, 24], sizes = [8, 8], strides = [1, 1]} : vector<8x32xf32> to vector<8x8xf32>
    %56 = vector.extract_strided_slice %8 {offsets = [0, 24], sizes = [8, 8], strides = [1, 1]} : vector<8x32xf32> to vector<8x8xf32>
    %cst_21 = arith.constant dense<0.000000e+00> : vector<8x8xf32>
    %57 = tpu.matmul %54, %55, %cst_21 {dimension_numbers = #tpu.dot_dimension_numbers<[1], [1], [0], [0], [0, 0, 1, 0], [], []>} : vector<8x8xf32>, vector<8x8xf32>, vector<8x8xf32> -> vector<8x8xf32>
    %cst_22 = arith.constant dense<0xFF800000> : vector<8xf32>
    %58 = vector.multi_reduction <maximumf>, %57, %cst_22 [1] : vector<8x8xf32> to vector<8xf32>
    %59 = vector.shape_cast %58 : vector<8xf32> to vector<8x1xf32>
    %60 = vector.broadcast %59 : vector<8x1xf32> to vector<8x8xf32>
    %61 = arith.subf %57, %60 : vector<8x8xf32>
    %62 = math.exp %61 : vector<8x8xf32>
    %cst_23 = arith.constant dense<0.000000e+00> : vector<8xf32>
    %63 = vector.multi_reduction <add>, %62, %cst_23 [1] : vector<8x8xf32> to vector<8xf32>
    %64 = vector.shape_cast %63 : vector<8xf32> to vector<8x1xf32>
    %65 = tpu.reciprocal %64 {approx = true} : vector<8x1xf32> -> vector<8x1xf32>
    %cst_24 = arith.constant dense<0.000000e+00> : vector<8x8xf32>
    %66 = tpu.matmul %62, %56, %cst_24 {dimension_numbers = #tpu.dot_dimension_numbers<[1], [0], [0], [1], [0, 0, 1, 1], [], []>} : vector<8x8xf32>, vector<8x8xf32>, vector<8x8xf32> -> vector<8x8xf32>
    %67 = vector.broadcast %65 : vector<8x1xf32> to vector<8x8xf32>
    %68 = arith.mulf %66, %67 : vector<8x8xf32>
    %69 = tpu.concatenate %23, %38, %53, %68 in 1 : vector<8x8xf32>, vector<8x8xf32>, vector<8x8xf32>, vector<8x8xf32> -> vector<8x32xf32>
    %c0_25 = arith.constant 0 : index
    %c0_26 = arith.constant 0 : index
    %70 = vector.load %arg8[%c0_25, %c0_26] : memref<32x32xf32, #tpu.memory_space<vmem>>, vector<32x32xf32>
    %cst_27 = arith.constant dense<0.000000e+00> : vector<8x32xf32>
    %71 = tpu.matmul %69, %70, %cst_27 {dimension_numbers = #tpu.dot_dimension_numbers<[1], [0], [0], [1], [0, 0, 1, 1], [], []>} : vector<8x32xf32>, vector<32x32xf32>, vector<8x32xf32> -> vector<8x32xf32>
    %c0_28 = arith.constant 0 : index
    %c0_29 = arith.constant 0 : index
    %72 = vector.load %arg9[%c0_28, %c0_29] : memref<1x32xf32, #tpu.memory_space<vmem>>, vector<1x32xf32>
    %73 = vector.broadcast %72 : vector<1x32xf32> to vector<8x32xf32>
    %74 = arith.addf %71, %73 : vector<8x32xf32>
    %c0_30 = arith.constant 0 : index
    %c0_31 = arith.constant 0 : index
    %c0_32 = arith.constant 0 : index
    %75 = vector.load %arg10[%c0_30, %c0_31, %c0_32] : memref<1x8x32xf32, #tpu.memory_space<vmem>>, vector<1x8x32xf32>
    %76 = vector.shape_cast %75 : vector<1x8x32xf32> to vector<8x32xf32>
    %77 = vector.shape_cast %74 : vector<8x32xf32> to vector<1x8x32xf32>
    tpu.vector_store %arg10[%c0_30, %c0_31, %c0_32], %77 {strides = array<i32>} : memref<1x8x32xf32, #tpu.memory_space<vmem>>, vector<1x8x32xf32>,
    return
  }
  func.func @transform_0(%arg0: i32, %arg1: i32) -> (i32, i32, i32) {
    %c0_i32 = arith.constant 0 : i32
    %c0_i32_0 = arith.constant 0 : i32
    return %arg0, %arg1, %c0_i32 : i32, i32, i32
  }
  func.func @transform_1(%arg0: i32, %arg1: i32) -> (i32, i32, i32) {
    %c0_i32 = arith.constant 0 : i32
    %c0_i32_0 = arith.constant 0 : i32
    %c0_i32_1 = arith.constant 0 : i32
    return %arg0, %c0_i32, %c0_i32_0 : i32, i32, i32
  }
  func.func @transform_2(%arg0: i32, %arg1: i32) -> (i32, i32, i32) {
    %c0_i32 = arith.constant 0 : i32
    %c0_i32_0 = arith.constant 0 : i32
    %c0_i32_1 = arith.constant 0 : i32
    return %arg0, %c0_i32, %c0_i32_0 : i32, i32, i32
  }
  func.func @transform_3(%arg0: i32, %arg1: i32) -> (i32, i32) {
    %c0_i32 = arith.constant 0 : i32
    %c0_i32_0 = arith.constant 0 : i32
    %c0_i32_1 = arith.constant 0 : i32
    return %c0_i32, %c0_i32_0 : i32, i32
  }
  func.func @transform_4(%arg0: i32, %arg1: i32) -> (i32, i32) {
    %c0_i32 = arith.constant 0 : i32
    %c0_i32_0 = arith.constant 0 : i32
    %c0_i32_1 = arith.constant 0 : i32
    return %c0_i32, %c0_i32_0 : i32, i32
  }
  func.func @transform_5(%arg0: i32, %arg1: i32) -> (i32, i32) {
    %c0_i32 = arith.constant 0 : i32
    %c0_i32_0 = arith.constant 0 : i32
    %c0_i32_1 = arith.constant 0 : i32
    return %c0_i32, %c0_i32_0 : i32, i32
  }
  func.func @transform_6(%arg0: i32, %arg1: i32) -> (i32, i32) {
    %c0_i32 = arith.constant 0 : i32
    %c0_i32_0 = arith.constant 0 : i32
    %c0_i32_1 = arith.constant 0 : i32
    return %c0_i32, %c0_i32_0 : i32, i32
  }
  func.func @transform_7(%arg0: i32, %arg1: i32) -> (i32, i32) {
    %c0_i32 = arith.constant 0 : i32
    %c0_i32_0 = arith.constant 0 : i32
    %c0_i32_1 = arith.constant 0 : i32
    return %c0_i32, %c0_i32_0 : i32, i32
  }
  func.func @transform_8(%arg0: i32, %arg1: i32) -> (i32, i32, i32) {
    %c0_i32 = arith.constant 0 : i32
    %c0_i32_0 = arith.constant 0 : i32
    return %arg0, %arg1, %c0_i32 : i32, i32, i32
  }
}

</mosaic_0001>

<llo_original>
// kernel: tpu_custom_call.1
$region0: #{tpu_custom_call.1}
  #allocation0 [shape = 'u32[]', space=smem, size = 0x4, offset = 0x4, fixed_abs, tag = 'smem constant byte address 0x4 - core index']
  #allocation1 [shape = 'u32[72,128]{1,0:T(1,128)}', space=vmem, size = 0x9000, scoped, tag = 'internal scratch']
  #allocation2 [shape = 'f32[8,32]{1,0:T(8,128)}', space=vmem, size = 0x1000, scoped, tag = 'scratch operand']
  #allocation3 [shape = 'f32[8,32]{1,0:T(8,128)}', space=vmem, size = 0x1000, scoped, tag = 'scratch operand']
  %s0 = inlined_call_operand.hbm [shape: f32[2,16,32], index: 0, kind: input, shape index: {}]
  %s1 = inlined_call_operand.hbm [shape: f32[2,8,32], index: 1, kind: input, shape index: {}]
  %s2 = inlined_call_operand.hbm [shape: f32[2,8,32], index: 2, kind: input, shape index: {}]
  %s3 = inlined_call_operand.hbm [shape: f32[32,32], index: 3, kind: input, shape index: {}]
  %s4 = inlined_call_operand.hbm [shape: f32[32,32], index: 4, kind: input, shape index: {}]
  %s5 = inlined_call_operand.hbm [shape: f32[32,32], index: 5, kind: input, shape index: {}]
  %s6 = inlined_call_operand.hbm [shape: f32[32,32], index: 6, kind: input, shape index: {}]
  %s7 = inlined_call_operand.vmem [shape: f32[1,32], index: 7, kind: input, shape index: {}]
  %s8 = inlined_call_operand.hbm [shape: f32[2,16,32], index: 8, kind: output, shape index: {}]
  %s9 = sld [smem:[#allocation0]]
  $region97: #{tpu_custom_call.1} parent=0
    _
  %s11 = ssub.s32 1, %s9
  %s12 = scalar_select 0, %s11, %s9
  $region1: #{tpu_custom_call.1} parent=0
    #allocation4 [shape = 'u8[8192]{0}', space=vmem, size = 0x2000, scoped, tag = 'input window, operand 0']
    #allocation5 [shape = 's32[2]{0}', space=sflag, size = 0x8, scoped, tag = 'scoped memory for tpu_custom_call.1']
    #allocation6 [shape = 's32[2]{0}', space=sflag, size = 0x8, scoped, tag = 'scoped memory for tpu_custom_call.1']
    #allocation7 [shape = 'u8[8192]{0}', space=vmem, size = 0x2000, scoped, tag = 'input window, operand 1']
    #allocation8 [shape = 's32[2]{0}', space=sflag, size = 0x8, scoped, tag = 'scoped memory for tpu_custom_call.1']
    #allocation9 [shape = 'u8[8192]{0}', space=vmem, size = 0x2000, scoped, tag = 'input window, operand 2']
    #allocation10 [shape = 'u8[16384]{0}', space=vmem, size = 0x4000, scoped, tag = 'input window, operand 3, single buffered']
    #allocation11 [shape = 's32[1]{0}', space=sflag, size = 0x4, scoped, tag = 'scoped memory for tpu_custom_call.1']
    #allocation12 [shape = 'u8[16384]{0}', space=vmem, size = 0x4000, scoped, tag = 'input window, operand 4, single buffered']
    #allocation13 [shape = 'u8[16384]{0}', space=vmem, size = 0x4000, scoped, tag = 'input window, operand 5, single buffered']
    #allocation14 [shape = 's32[1]{0}', space=sflag, size = 0x4, scoped, tag = 'scoped memory for tpu_custom_call.1']
    #allocation15 [shape = 'u8[16384]{0}', space=vmem, size = 0x4000, scoped, tag = 'input window, operand 6, single buffered']
    #allocation16 [shape = 'u8[8192]{0}', space=vmem, size = 0x2000, scoped, tag = 'output window, operand 0']
    %13 = vsyncpa [#allocation5], 0
    %s14 = scalar_lea.sflag [#allocation5], 1
    %15 = vsyncpa %s14, 0
    %16 = vsyncpa [#allocation8], 0
    %s17 = scalar_lea.sflag [#allocation8], 1
    %18 = vsyncpa %s17, 0
    %19 = vsyncpa [#allocation11], 0
    %20 = vsyncpa [#allocation14], 0
    %21 = vsyncpa [#allocation6], 0
    %s22 = scalar_lea.sflag [#allocation6], 1
    %23 = vsyncpa %s22, 0
    loop: start=0, step=1, limit=6
    $region2: #{tpu_custom_call.1} parent=1 // loop_pre_header
      _
    $region3: #{tpu_custom_call.1} parent=1 // loop_header
      %s25 = sphi 0, %s29
      %p26 = scmp.ge.s32.totalorder %s25, 6
      %s32 = sphi 0, %s44
      %s33 = sphi 0, %s40
      %s34 = sphi 0, %s32
      %s35 = sphi 0, %s33
      %s36 = sphi 0, %s34
      %s37 = sphi 0, %s35
      %s49 = sphi 0, %s51
      %s52 = sphi 0, %s49
      %s53 = sphi 0, %s52
      %s69 = sphi 0, %s53
      %s75 = sphi 0, %s77
      %s78 = sphi 0, %s75
      %s79 = sphi 0, %s78
      %s95 = sphi 0, %s79
      %s101 = sphi 0, %s103
      %s104 = sphi 0, %s101
      %s105 = sphi 0, %s104
      %s121 = sphi 0, %s105
      %s125 = sphi 0, %s125
      %s127 = sphi 0, %s125
      %s128 = sphi 0, %s127
      %s142 = sphi 0, %s128
      %s146 = sphi 0, %s146
      %s148 = sphi 0, %s146
      %s149 = sphi 0, %s148
      %s163 = sphi 0, %s149
      %s167 = sphi 0, %s167
      %s169 = sphi 0, %s167
      %s170 = sphi 0, %s169
      %s184 = sphi 0, %s170
      %s188 = sphi 0, %s188
      %s190 = sphi 0, %s188
      %s191 = sphi 0, %s190
      %s205 = sphi 0, %s191
      %s209 = sphi 0, %s209
      %s211 = sphi 0, %s209
      %s212 = sphi 0, %s211
      %s226 = sphi 0, %s212
      %s234 = sphi 0, %s236
      %s237 = sphi 0, %s234
      %s238 = sphi 0, %s237
      %s254 = sphi 0, %s238
    $region4: #{tpu_custom_call.1} parent=1 // loop_header_branch
      %28 = sbr.rel (%p26) target = $region8
    $region5: #{tpu_custom_call.1} parent=1 // loop_body
      %s30 = ssub.s32 %s25, 1
      %s31 = ssub.s32 %s25, 2
      %s38 = sadd.s32 1, %s33
      %p39 = scmp.ge.s32.totalorder %s38, 2
      %s40 = scalar_select %p39, 0, %s38
      %s41 = sadd.s32 1, %s32
      %s42 = scalar_select %p39, %s41, %s32
      %p43 = scmp.ge.s32.totalorder %s42, 2
      %s44 = scalar_select %p43, 0, %s42
      %s45 = ssub.s32 %s32, %s44
      %s46 = ssub.s32 %s33, %s40
      %s47 = sor.u32 %s45, %s46
      %p48 = scmp.eq.s32.totalorder %s47, 0
      %s50 = sadd.s32 %s49, 1
      %s51 = scalar_select %p48, %s49, %s50
      %p54 = pneg %p48
      %p55 = scmp.eq.s32.totalorder %s25, 3
      %p56 = por %p54, %p55
      %p57 = scmp.ne.s32.totalorder %s49, %s52
      %p58 = scmp.eq.s32.totalorder %s25, 0
      %p59 = por %p57, %p58
      %p60 = scmp.ne.s32.totalorder %s49, %s52
      %p61 = scmp.eq.s32.totalorder %s30, 3
      %p62 = por %p60, %p61
      %p63 = scmp.ne.s32.totalorder %s52, %s53
      %p64 = scmp.eq.s32.totalorder %s30, 0
      %p65 = por %p63, %p64
      %p66 = scmp.ne.s32.totalorder %s52, %s53
      %p67 = scmp.eq.s32.totalorder %s31, 3
      %p68 = por %p66, %p67
      %p70 = scmp.ne.s32.totalorder %s53, %s69
      %p71 = scmp.eq.s32.totalorder %s31, 0
      %p72 = por %p70, %p71
      %s73 = ssub.s32 %s32, %s44
      %p74 = scmp.eq.s32.totalorder %s73, 0
      %s76 = sadd.s32 %s75, 1
      %s77 = scalar_select %p74, %s75, %s76
      %p80 = pneg %p74
      %p81 = scmp.eq.s32.totalorder %s25, 3
      %p82 = por %p80, %p81
      %p83 = scmp.ne.s32.totalorder %s75, %s78
      %p84 = scmp.eq.s32.totalorder %s25, 0
      %p85 = por %p83, %p84
      %p86 = scmp.ne.s32.totalorder %s75, %s78
      %p87 = scmp.eq.s32.totalorder %s30, 3
      %p88 = por %p86, %p87
      %p89 = scmp.ne.s32.totalorder %s78, %s79
      %p90 = scmp.eq.s32.totalorder %s30, 0
      %p91 = por %p89, %p90
      %p92 = scmp.ne.s32.totalorder %s78, %s79
      %p93 = scmp.eq.s32.totalorder %s31, 3
      %p94 = por %p92, %p93
      %p96 = scmp.ne.s32.totalorder %s79, %s95
      %p97 = scmp.eq.s32.totalorder %s31, 0
      %p98 = por %p96, %p97
      %s99 = ssub.s32 %s32, %s44
      %p100 = scmp.eq.s32.totalorder %s99, 0
      %s102 = sadd.s32 %s101, 1
      %s103 = scalar_select %p100, %s101, %s102
      %p106 = pneg %p100
      %p107 = scmp.eq.s32.totalorder %s25, 3
      %p108 = por %p106, %p107
      %p109 = scmp.ne.s32.totalorder %s101, %s104
      %p110 = scmp.eq.s32.totalorder %s25, 0
      %p111 = por %p109, %p110
      %p112 = scmp.ne.s32.totalorder %s101, %s104
      %p113 = scmp.eq.s32.totalorder %s30, 3
      %p114 = por %p112, %p113
      %p115 = scmp.ne.s32.totalorder %s104, %s105
      %p116 = scmp.eq.s32.totalorder %s30, 0
      %p117 = por %p115, %p116
      %p118 = scmp.ne.s32.totalorder %s104, %s105
      %p119 = scmp.eq.s32.totalorder %s31, 3
      %p120 = por %p118, %p119
      %p122 = scmp.ne.s32.totalorder %s105, %s121
      %p123 = scmp.eq.s32.totalorder %s31, 0
      %p124 = por %p122, %p123
      %s126 = sadd.s32 %s125, 1
      %p129 = scmp.eq.s32.totalorder %s25, 3
      %p130 = scmp.ne.s32.totalorder %s125, %s127
      %p131 = scmp.eq.s32.totalorder %s25, 0
      %p132 = por %p130, %p131
      %p133 = scmp.ne.s32.totalorder %s125, %s127
      %p134 = scmp.eq.s32.totalorder %s30, 3
      %p135 = por %p133, %p134
      %p136 = scmp.ne.s32.totalorder %s127, %s128
      %p137 = scmp.eq.s32.totalorder %s30, 0
      %p138 = por %p136, %p137
      %p139 = scmp.ne.s32.totalorder %s127, %s128
      %p140 = scmp.eq.s32.totalorder %s31, 3
      %p141 = por %p139, %p140
      %p143 = scmp.ne.s32.totalorder %s128, %s142
      %p144 = scmp.eq.s32.totalorder %s31, 0
      %p145 = por %p143, %p144
      %s147 = sadd.s32 %s146, 1
      %p150 = scmp.eq.s32.totalorder %s25, 3
      %p151 = scmp.ne.s32.totalorder %s146, %s148
      %p152 = scmp.eq.s32.totalorder %s25, 0
      %p153 = por %p151, %p152
      %p154 = scmp.ne.s32.totalorder %s146, %s148
      %p155 = scmp.eq.s32.totalorder %s30, 3
      %p156 = por %p154, %p155
      %p157 = scmp.ne.s32.totalorder %s148, %s149
      %p158 = scmp.eq.s32.totalorder %s30, 0
      %p159 = por %p157, %p158
      %p160 = scmp.ne.s32.totalorder %s148, %s149
      %p161 = scmp.eq.s32.totalorder %s31, 3
      %p162 = por %p160, %p161
      %p164 = scmp.ne.s32.totalorder %s149, %s163
      %p165 = scmp.eq.s32.totalorder %s31, 0
      %p166 = por %p164, %p165
      %s168 = sadd.s32 %s167, 1
      %p171 = scmp.eq.s32.totalorder %s25, 3
      %p172 = scmp.ne.s32.totalorder %s167, %s169
      %p173 = scmp.eq.s32.totalorder %s25, 0
      %p174 = por %p172, %p173
      %p175 = scmp.ne.s32.totalorder %s167, %s169
      %p176 = scmp.eq.s32.totalorder %s30, 3
      %p177 = por %p175, %p176
      %p178 = scmp.ne.s32.totalorder %s169, %s170
      %p179 = scmp.eq.s32.totalorder %s30, 0
      %p180 = por %p178, %p179
      %p181 = scmp.ne.s32.totalorder %s169, %s170
      %p182 = scmp.eq.s32.totalorder %s31, 3
      %p183 = por %p181, %p182
      %p185 = scmp.ne.s32.totalorder %s170, %s184
      %p186 = scmp.eq.s32.totalorder %s31, 0
      %p187 = por %p185, %p186
      %s189 = sadd.s32 %s188, 1
      %p192 = scmp.eq.s32.totalorder %s25, 3
      %p193 = scmp.ne.s32.totalorder %s188, %s190
      %p194 = scmp.eq.s32.totalorder %s25, 0
      %p195 = por %p193, %p194
      %p196 = scmp.ne.s32.totalorder %s188, %s190
      %p197 = scmp.eq.s32.totalorder %s30, 3
      %p198 = por %p196, %p197
      %p199 = scmp.ne.s32.totalorder %s190, %s191
      %p200 = scmp.eq.s32.totalorder %s30, 0
      %p201 = por %p199, %p200
      %p202 = scmp.ne.s32.totalorder %s190, %s191
      %p203 = scmp.eq.s32.totalorder %s31, 3
      %p204 = por %p202, %p203
      %p206 = scmp.ne.s32.totalorder %s191, %s205
      %p207 = scmp.eq.s32.totalorder %s31, 0
      %p208 = por %p206, %p207
      %s210 = sadd.s32 %s209, 1
      %p213 = scmp.eq.s32.totalorder %s25, 3
      %p214 = scmp.ne.s32.totalorder %s209, %s211
      %p215 = scmp.eq.s32.totalorder %s25, 0
      %p216 = por %p214, %p215
      %p217 = scmp.ne.s32.totalorder %s209, %s211
      %p218 = scmp.eq.s32.totalorder %s30, 3
      %p219 = por %p217, %p218
      %p220 = scmp.ne.s32.totalorder %s211, %s212
      %p221 = scmp.eq.s32.totalorder %s30, 0
      %p222 = por %p220, %p221
      %p223 = scmp.ne.s32.totalorder %s211, %s212
      %p224 = scmp.eq.s32.totalorder %s31, 3
      %p225 = por %p223, %p224
      %p227 = scmp.ne.s32.totalorder %s212, %s226
      %p228 = scmp.eq.s32.totalorder %s31, 0
      %p229 = por %p227, %p228
      %s230 = ssub.s32 %s32, %s44
      %s231 = ssub.s32 %s33, %s40
      %s232 = sor.u32 %s230, %s231
      %p233 = scmp.eq.s32.totalorder %s232, 0
      %s235 = sadd.s32 %s234, 1
      %s236 = scalar_select %p233, %s234, %s235
      %p239 = pneg %p233
      %p240 = scmp.eq.s32.totalorder %s25, 3
      %p241 = por %p239, %p240
      %p242 = scmp.ne.s32.totalorder %s234, %s237
      %p243 = scmp.eq.s32.totalorder %s25, 0
      %p244 = por %p242, %p243
      %p245 = scmp.ne.s32.totalorder %s234, %s237
      %p246 = scmp.eq.s32.totalorder %s30, 3
      %p247 = por %p245, %p246
      %p248 = scmp.ne.s32.totalorder %s237, %s238
      %p249 = scmp.eq.s32.totalorder %s30, 0
      %p250 = por %p248, %p249
      %p251 = scmp.ne.s32.totalorder %s237, %s238
      %p252 = scmp.eq.s32.totalorder %s31, 3
      %p253 = por %p251, %p252
      %p255 = scmp.ne.s32.totalorder %s238, %s254
      %p256 = scmp.eq.s32.totalorder %s31, 0
      %p257 = por %p255, %p256
      %p258 = scmp.le.s32.totalorder 1, %s25
      %p259 = scmp.lt.s32.totalorder %s25, 5
      %p260 = pnand %p258, %p259
      %p261 = pneg %p260
      // Predicated region
      $region9: #{tpu_custom_call.1} parent=5 // pred_check
        _
      $region10: #{tpu_custom_call.1} parent=5 // pred_check_branch
        %263 = sbr.rel (%p260) target = $region12
      $region11: #{tpu_custom_call.1} parent=5 // pred_region
        %s264 = ssub.s32 %s25, 1
        // Predicated region
        $region13: #{tpu_custom_call.1} parent=11 // pred_check
          %p265 = pneg %p138
        $region14: #{tpu_custom_call.1} parent=11 // pred_check_branch
          %267 = sbr.rel (%p265) target = $region16
        $region15: #{tpu_custom_call.1} parent=11 // pred_region
          %269 = vsyncadd [#allocation11], 0
          %s270 = sshll.u32 %s3, 4
          %s271 = int_to_ptr.hbm [resolvable:$true] %s270
          %s272 = sshll.u32 [#allocation10], 4
          %s273 = int_to_ptr.vmem [resolvable:$true] %s272
          %278 = dma.hbm_to_vmem [thread:$0]  %s271, 512, %s273, [#allocation11], 128, 128, 8
        $region16: #{tpu_custom_call.1} parent=11 // pred_fallthru
          _
        // Predicated region
        $region17: #{tpu_custom_call.1} parent=11 // pred_check
          %p279 = pneg %p159
        $region18: #{tpu_custom_call.1} parent=11 // pred_check_branch
          %281 = sbr.rel (%p279) target = $region20
        $region19: #{tpu_custom_call.1} parent=11 // pred_region
          %283 = vsyncadd [#allocation11], 0
          %s284 = sshll.u32 %s4, 4
          %s285 = int_to_ptr.hbm [resolvable:$true] %s284
          %s286 = sshll.u32 [#allocation12], 4
          %s287 = int_to_ptr.vmem [resolvable:$true] %s286
          %292 = dma.hbm_to_vmem [thread:$0]  %s285, 512, %s287, [#allocation11], 128, 128, 8
        $region20: #{tpu_custom_call.1} parent=11 // pred_fallthru
          _
        // Predicated region
        $region21: #{tpu_custom_call.1} parent=11 // pred_check
          %p293 = pneg %p180
        $region22: #{tpu_custom_call.1} parent=11 // pred_check_branch
          %295 = sbr.rel (%p293) target = $region24
        $region23: #{tpu_custom_call.1} parent=11 // pred_region
          %297 = vsyncadd [#allocation14], 0
          %s298 = sshll.u32 %s5, 4
          %s299 = int_to_ptr.hbm [resolvable:$true] %s298
          %s300 = sshll.u32 [#allocation13], 4
          %s301 = int_to_ptr.vmem [resolvable:$true] %s300
          %306 = dma.hbm_to_vmem [thread:$0]  %s299, 512, %s301, [#allocation14], 128, 128, 8
        $region24: #{tpu_custom_call.1} parent=11 // pred_fallthru
          _
        // Predicated region
        $region25: #{tpu_custom_call.1} parent=11 // pred_check
          %p307 = pneg %p201
        $region26: #{tpu_custom_call.1} parent=11 // pred_check_branch
          %309 = sbr.rel (%p307) target = $region28
        $region27: #{tpu_custom_call.1} parent=11 // pred_region
          %311 = vsyncadd [#allocation14], 0
          %s312 = sshll.u32 %s6, 4
          %s313 = int_to_ptr.hbm [resolvable:$true] %s312
          %s314 = sshll.u32 [#allocation15], 4
          %s315 = int_to_ptr.vmem [resolvable:$true] %s314
          %320 = dma.hbm_to_vmem [thread:$0]  %s313, 512, %s315, [#allocation14], 128, 128, 8
        $region28: #{tpu_custom_call.1} parent=11 // pred_fallthru
          _
        // Predicated region
        $region29: #{tpu_custom_call.1} parent=11 // pred_check
          %p321 = pneg %p222
        $region30: #{tpu_custom_call.1} parent=11 // pred_check_branch
          %323 = sbr.rel (%p321) target = $region32
        $region31: #{tpu_custom_call.1} parent=11 // pred_region
          _
        $region32: #{tpu_custom_call.1} parent=11 // pred_fallthru
          _
      $region12: #{tpu_custom_call.1} parent=5 // pred_fallthru
        _
      %p324 = scmp.lt.s32.totalorder %s25, 4
      // Predicated region
      $region33: #{tpu_custom_call.1} parent=5 // pred_check
        %p325 = pneg %p324
      $region34: #{tpu_custom_call.1} parent=5 // pred_check_branch
        %327 = sbr.rel (%p325) target = $region36
      $region35: #{tpu_custom_call.1} parent=5 // pred_region
        // Predicated region
        $region37: #{tpu_custom_call.1} parent=35 // pred_check
          %p328 = pneg %p59
        $region38: #{tpu_custom_call.1} parent=35 // pred_check_branch
          %330 = sbr.rel (%p328) target = $region40
        $region39: #{tpu_custom_call.1} parent=35 // pred_region
          %s331 = sand.u32 %s49, 1
          %s332 = scalar_lea.sflag [#allocation5], %s331
          %s333 = sand.u32 %s49, 1
          %s334 = smul.addr %s333, 8
          %s335 = scalar_lea.vmem [#allocation4], %s334
          %337 = vsyncadd %s332, 0
          %s338 = smul.addr %s32, 2
          %s339 = sadd.s32 %s33, %s338
          %s340 = smul.addr %s339, 8
          %s341 = scalar_lea.hbm %s0, %s340
          %s343 = sshll.u32 %s341, 4
          %s344 = int_to_ptr.hbm [resolvable:$true] %s343
          %s345 = sshll.u32 %s335, 4
          %s346 = int_to_ptr.vmem [resolvable:$true] %s345
          %348 = dma.hbm_to_vmem [thread:$0]  %s344, 128, %s346, %s332
        $region40: #{tpu_custom_call.1} parent=35 // pred_fallthru
          _
        // Predicated region
        $region41: #{tpu_custom_call.1} parent=35 // pred_check
          %p349 = pneg %p85
        $region42: #{tpu_custom_call.1} parent=35 // pred_check_branch
          %351 = sbr.rel (%p349) target = $region44
        $region43: #{tpu_custom_call.1} parent=35 // pred_region
          %s352 = sand.u32 %s25, 1
          %s353 = scalar_lea.sflag [#allocation8], %s352
          %s354 = sand.u32 %s75, 1
          %s355 = smul.addr %s354, 8
          %s356 = scalar_lea.vmem [#allocation7], %s355
          %358 = vsyncadd %s353, 0
          %s359 = smul.addr %s32, 8
          %s360 = scalar_lea.hbm %s1, %s359
          %s362 = sshll.u32 %s360, 4
          %s363 = int_to_ptr.hbm [resolvable:$true] %s362
          %s364 = sshll.u32 %s356, 4
          %s365 = int_to_ptr.vmem [resolvable:$true] %s364
          %367 = dma.hbm_to_vmem [thread:$0]  %s363, 128, %s365, %s353
        $region44: #{tpu_custom_call.1} parent=35 // pred_fallthru
          _
        // Predicated region
        $region45: #{tpu_custom_call.1} parent=35 // pred_check
          %p368 = pneg %p111
        $region46: #{tpu_custom_call.1} parent=35 // pred_check_branch
          %370 = sbr.rel (%p368) target = $region48
        $region47: #{tpu_custom_call.1} parent=35 // pred_region
          %s371 = sand.u32 %s25, 1
          %s372 = scalar_lea.sflag [#allocation8], %s371
          %s373 = sand.u32 %s101, 1
          %s374 = smul.addr %s373, 8
          %s375 = scalar_lea.vmem [#allocation9], %s374
          %377 = vsyncadd %s372, 0
          %s378 = smul.addr %s32, 8
          %s379 = scalar_lea.hbm %s2, %s378
          %s381 = sshll.u32 %s379, 4
          %s382 = int_to_ptr.hbm [resolvable:$true] %s381
          %s383 = sshll.u32 %s375, 4
          %s384 = int_to_ptr.vmem [resolvable:$true] %s383
          %386 = dma.hbm_to_vmem [thread:$0]  %s382, 128, %s384, %s372
        $region48: #{tpu_custom_call.1} parent=35 // pred_fallthru
          _
      $region36: #{tpu_custom_call.1} parent=5 // pred_fallthru
        _
      %p387 = scmp.le.s32.totalorder 1, %s25
      %p388 = scmp.lt.s32.totalorder %s25, 5
      %p389 = pnand %p387, %p388
      %p390 = pneg %p389
      // Predicated region
      $region49: #{tpu_custom_call.1} parent=5 // pred_check
        _
      $region50: #{tpu_custom_call.1} parent=5 // pred_check_branch
        %392 = sbr.rel (%p389) target = $region52
      $region51: #{tpu_custom_call.1} parent=5 // pred_region
        %s393 = ssub.s32 %s25, 1
        %s394 = sand.u32 %s52, 1
        %s395 = scalar_lea.sflag [#allocation5], %s394
        %s396 = sand.u32 %s52, 1
        %s397 = smul.addr %s396, 8
        %s398 = scalar_lea.vmem [#allocation4], %s397
        // Predicated region
        $region53: #{tpu_custom_call.1} parent=51 // pred_check
          %p399 = pneg %p65
        $region54: #{tpu_custom_call.1} parent=51 // pred_check_branch
          %401 = sbr.rel (%p399) target = $region56
        $region55: #{tpu_custom_call.1} parent=51 // pred_region
          %403 = dma.done %s395, 128
        $region56: #{tpu_custom_call.1} parent=51 // pred_fallthru
          _
        %s404 = sand.u32 %s30, 1
        %s405 = scalar_lea.sflag [#allocation8], %s404
        %s406 = sand.u32 %s78, 1
        %s407 = smul.addr %s406, 8
        %s408 = scalar_lea.vmem [#allocation7], %s407
        // Predicated region
        $region57: #{tpu_custom_call.1} parent=51 // pred_check
          %p409 = pneg %p91
        $region58: #{tpu_custom_call.1} parent=51 // pred_check_branch
          %411 = sbr.rel (%p409) target = $region60
        $region59: #{tpu_custom_call.1} parent=51 // pred_region
          %413 = dma.done %s405, 128
        $region60: #{tpu_custom_call.1} parent=51 // pred_fallthru
          _
        %s414 = sand.u32 %s30, 1
        %s415 = scalar_lea.sflag [#allocation8], %s414
        %s416 = sand.u32 %s104, 1
        %s417 = smul.addr %s416, 8
        %s418 = scalar_lea.vmem [#allocation9], %s417
        // Predicated region
        $region61: #{tpu_custom_call.1} parent=51 // pred_check
          %p419 = pneg %p117
        $region62: #{tpu_custom_call.1} parent=51 // pred_check_branch
          %421 = sbr.rel (%p419) target = $region64
        $region63: #{tpu_custom_call.1} parent=51 // pred_region
          %423 = dma.done %s415, 128
        $region64: #{tpu_custom_call.1} parent=51 // pred_fallthru
          _
        // Predicated region
        $region65: #{tpu_custom_call.1} parent=51 // pred_check
          %p424 = pneg %p138
        $region66: #{tpu_custom_call.1} parent=51 // pred_check_branch
          %426 = sbr.rel (%p424) target = $region68
        $region67: #{tpu_custom_call.1} parent=51 // pred_region
          %428 = dma.done [#allocation11], 512
        $region68: #{tpu_custom_call.1} parent=51 // pred_fallthru
          _
        // Predicated region
        $region69: #{tpu_custom_call.1} parent=51 // pred_check
          %p429 = pneg %p159
        $region70: #{tpu_custom_call.1} parent=51 // pred_check_branch
          %431 = sbr.rel (%p429) target = $region72
        $region71: #{tpu_custom_call.1} parent=51 // pred_region
          %433 = dma.done [#allocation11], 512
        $region72: #{tpu_custom_call.1} parent=51 // pred_fallthru
          _
        // Predicated region
        $region73: #{tpu_custom_call.1} parent=51 // pred_check
          %p434 = pneg %p180
        $region74: #{tpu_custom_call.1} parent=51 // pred_check_branch
          %436 = sbr.rel (%p434) target = $region76
        $region75: #{tpu_custom_call.1} parent=51 // pred_region
          %438 = dma.done [#allocation14], 512
        $region76: #{tpu_custom_call.1} parent=51 // pred_fallthru
          _
        // Predicated region
        $region77: #{tpu_custom_call.1} parent=51 // pred_check
          %p439 = pneg %p201
        $region78: #{tpu_custom_call.1} parent=51 // pred_check_branch
          %441 = sbr.rel (%p439) target = $region80
        $region79: #{tpu_custom_call.1} parent=51 // pred_region
          %443 = dma.done [#allocation14], 512
        $region80: #{tpu_custom_call.1} parent=51 // pred_fallthru
          _
        %s444 = sand.u32 %s52, 1
        %s445 = scalar_lea.sflag [#allocation5], %s444
        %s446 = sand.u32 %s52, 1
        %s447 = smul.addr %s446, 8
        %s448 = scalar_lea.vmem [#allocation4], %s447
        %p449 = pneg %p65
        %p450 = pneg %p62
        %s451 = sand.u32 %s30, 1
        %s452 = scalar_lea.sflag [#allocation8], %s451
        %s453 = sand.u32 %s78, 1
        %s454 = smul.addr %s453, 8
        %s455 = scalar_lea.vmem [#allocation7], %s454
        %p456 = pneg %p91
        %p457 = pneg %p88
        %s458 = sand.u32 %s30, 1
        %s459 = scalar_lea.sflag [#allocation8], %s458
        %s460 = sand.u32 %s104, 1
        %s461 = smul.addr %s460, 8
        %s462 = scalar_lea.vmem [#allocation9], %s461
        %p463 = pneg %p117
        %p464 = pneg %p114
        %p465 = pneg %p138
        %p466 = pneg %p135
        %p467 = pneg %p159
        %p468 = pneg %p156
        %p469 = pneg %p180
        %p470 = pneg %p177
        %p471 = pneg %p201
        %p472 = pneg %p198
        %p473 = pneg %p222
        %p474 = pneg %p219
        %p475 = pneg %p250
        %p476 = pneg %p247
        %s477 = sand.u32 %s237, 1
        %s478 = scalar_lea.sflag [#allocation6], %s477
        %s479 = sand.u32 %s237, 1
        %s480 = smul.addr %s479, 8
        %s481 = scalar_lea.vmem [#allocation16], %s480
        %p482 = scmp.eq.s32.totalorder %s35, 0
        // Predicated region
        $region81: #{tpu_custom_call.1} parent=51 // pred_check
          %p483 = pneg %p482
        $region82: #{tpu_custom_call.1} parent=51 // pred_check_branch
          %485 = sbr.rel (%p483) target = $region84
        $region83: #{tpu_custom_call.1} parent=51 // pred_region
          %v486 = vld [vmem:[%s408] sm:$0xff]
          %v487 = vld [vmem:[#allocation12] sm:$0xff]
          %v488 = vld [vmem:[#allocation12 + $0x8] sm:$0xff]
          %v489 = vld [vmem:[#allocation12 + $0x10] sm:$0xff]
          %v490 = vld [vmem:[#allocation12 + $0x18] sm:$0xff]
          %vm491 = vcmask 261120
          %v493 = vsel %vm491, %v486, 0
          %495 = vmatpush.msra.mxu0 0.0
          %496 = vmatpush.msra.mxu0 0.0
          %497 = vmatpush.msra.mxu0 0.0
          %498 = vmatpush.msra.mxu0 0.0
          %499 = vmatpush.msra.mxu0 0.0
          %500 = vmatpush.msra.mxu0 0.0
          %501 = vmatpush.msra.mxu0 0.0
          %502 = vmatpush.msra.mxu0 0.0
          %503 = vmatpush.msra.mxu0 0.0
          %504 = vmatpush.msra.mxu0 0.0
          %505 = vmatpush.msra.mxu0 0.0
          %506 = vmatpush.msra.mxu0 0.0
          %507 = vmatpush.msra.mxu0 %v490
          %508 = vmatpush.msra.mxu0 %v489
          %509 = vmatpush.msra.mxu0 %v488
          %510 = vmatpush.msra.mxu0 %v487
          %511 = vmatmul.f32.gmra.mxu0 %v493
          %v512 = vpop.f32.mrf.mxu0
          %v513 = vadd.f32 0.0, %v512
          %514 = vdwg.mxu0
          %515 = vst.msk [vmem:[#allocation2] sm:$0xff] %vm491, %v513
          %v516 = vld [vmem:[%s418] sm:$0xff]
          %v517 = vld [vmem:[#allocation13] sm:$0xff]
          %v518 = vld [vmem:[#allocation13 + $0x8] sm:$0xff]
          %v519 = vld [vmem:[#allocation13 + $0x10] sm:$0xff]
          %v520 = vld [vmem:[#allocation13 + $0x18] sm:$0xff]
          %v522 = vsel %vm491, %v516, 0
          %524 = vmatpush.msra.mxu0 0.0
          %525 = vmatpush.msra.mxu0 0.0
          %526 = vmatpush.msra.mxu0 0.0
          %527 = vmatpush.msra.mxu0 0.0
          %528 = vmatpush.msra.mxu0 0.0
          %529 = vmatpush.msra.mxu0 0.0
          %530 = vmatpush.msra.mxu0 0.0
          %531 = vmatpush.msra.mxu0 0.0
          %532 = vmatpush.msra.mxu0 0.0
          %533 = vmatpush.msra.mxu0 0.0
          %534 = vmatpush.msra.mxu0 0.0
          %535 = vmatpush.msra.mxu0 0.0
          %536 = vmatpush.msra.mxu0 %v520
          %537 = vmatpush.msra.mxu0 %v519
          %538 = vmatpush.msra.mxu0 %v518
          %539 = vmatpush.msra.mxu0 %v517
          %540 = vmatmul.f32.gmra.mxu0 %v522
          %v541 = vpop.f32.mrf.mxu0
          %v542 = vadd.f32 0.0, %v541
          %543 = vdwg.mxu0
          %544 = vst.msk [vmem:[#allocation3] sm:$0xff] %vm491, %v542
        $region84: #{tpu_custom_call.1} parent=51 // pred_fallthru
          _
        %v545 = vld [vmem:[%s398] sm:$0xff]
        %v546 = vld [vmem:[#allocation10] sm:$0xff]
        %v547 = vld [vmem:[#allocation10 + $0x8] sm:$0xff]
        %v548 = vld [vmem:[#allocation10 + $0x10] sm:$0xff]
        %v549 = vld [vmem:[#allocation10 + $0x18] sm:$0xff]
        %vm550 = vcmask 261120
        %v552 = vsel %vm550, %v545, 0
        %554 = vmatpush.msra.mxu0 0.0
        %555 = vmatpush.msra.mxu0 0.0
        %556 = vmatpush.msra.mxu0 0.0
        %557 = vmatpush.msra.mxu0 0.0
        %558 = vmatpush.msra.mxu0 0.0
        %559 = vmatpush.msra.mxu0 0.0
        %560 = vmatpush.msra.mxu0 0.0
        %561 = vmatpush.msra.mxu0 0.0
        %562 = vmatpush.msra.mxu0 0.0
        %563 = vmatpush.msra.mxu0 0.0
        %564 = vmatpush.msra.mxu0 0.0
        %565 = vmatpush.msra.mxu0 0.0
        %566 = vmatpush.msra.mxu0 %v549
        %567 = vmatpush.msra.mxu0 %v548
        %568 = vmatpush.msra.mxu0 %v547
        %569 = vmatpush.msra.mxu0 %v546
        %570 = vmatmul.f32.gmra.mxu0 %v552
        %v571 = vpop.f32.mrf.mxu0
        %v572 = vadd.f32 0.0, %v571
        %573 = vdwg.mxu0
        %v574 = vld [vmem:[#allocation2] sm:$0xff]
        %v575 = vld [vmem:[#allocation3] sm:$0xff]
        %vm576 = vcmask 64512
        %v578 = vsel %vm576, %v572, 0
        %v581 = vsel %vm576, %v574, 0
        %583 = vmatpush.xpose.msra.mxu0 0.0
        %584 = vmatpush.xpose.msra.mxu0 0.0
        %585 = vmatpush.xpose.msra.mxu0 0.0
        %586 = vmatpush.xpose.msra.mxu0 0.0
        %587 = vmatpush.xpose.msra.mxu0 0.0
        %588 = vmatpush.xpose.msra.mxu0 0.0
        %589 = vmatpush.xpose.msra.mxu0 0.0
        %590 = vmatpush.xpose.msra.mxu0 0.0
        %591 = vmatpush.xpose.msra.mxu0 0.0
        %592 = vmatpush.xpose.msra.mxu0 0.0
        %593 = vmatpush.xpose.msra.mxu0 0.0
        %594 = vmatpush.xpose.msra.mxu0 0.0
        %595 = vmatpush.xpose.msra.mxu0 0.0
        %596 = vmatpush.xpose.msra.mxu0 0.0
        %597 = vmatpush.xpose.msra.mxu0 0.0
        %598 = vmatpush.xpose.msra.mxu0 %v581
        %599 = vmatmul.f32.gmra.mxu0 %v578
        %v600 = vpop.f32.mrf.mxu0
        %v601 = vadd.f32 0.0, %v600
        %602 = vdwg.mxu0
        %v603 = vsel %vm576, %v601, -inf
        %604 = vmax.xlane.f32.xlu0 %v603
        %v605 = vpop.xlane.xlu0 %604
        %v606 = vsub.f32 %v601, %v605
        %v607 = vmul.f32 %v606, 1.442695
        %v608 = vpow.pop %v607
        %v609 = vsel %vm576, %v608, 0.0
        %610 = vadd.xlane.f32.xlu0 %v609
        %v611 = vpop.xlane.xlu0 %610
        %v612 = vrcp.pop %v611
        %v614 = vsel %vm576, %v608, 0
        %616 = vmatpush.msra.mxu0 0.0
        %617 = vmatpush.msra.mxu0 0.0
        %618 = vmatpush.msra.mxu0 0.0
        %619 = vmatpush.msra.mxu0 0.0
        %620 = vmatpush.msra.mxu0 0.0
        %621 = vmatpush.msra.mxu0 0.0
        %622 = vmatpush.msra.mxu0 0.0
        %623 = vmatpush.msra.mxu0 0.0
        %624 = vmatpush.msra.mxu0 0.0
        %625 = vmatpush.msra.mxu0 0.0
        %626 = vmatpush.msra.mxu0 0.0
        %627 = vmatpush.msra.mxu0 0.0
        %628 = vmatpush.msra.mxu0 0.0
        %629 = vmatpush.msra.mxu0 0.0
        %630 = vmatpush.msra.mxu0 0.0
        %631 = vmatpush.msra.mxu0 %v575
        %632 = vmatmul.f32.gmra.mxu0 %v614
        %v633 = vpop.f32.mrf.mxu0
        %v634 = vadd.f32 0.0, %v633
        %635 = vdwg.mxu0
        %v636 = vmul.f32 %v634, %v612
        %637 = vrot.lane.b32.xlu0 %v572, 120
        %v638 = vpop.permute.xlu0 %637
        %639 = vrot.lane.b32.xlu0 %v574, 120
        %v640 = vpop.permute.xlu0 %639
        %v641 = vsel %vm576, %v638, 0
        %v643 = vsel %vm576, %v640, 0
        %645 = vmatpush.xpose.msra.mxu0 0.0
        %646 = vmatpush.xpose.msra.mxu0 0.0
        %647 = vmatpush.xpose.msra.mxu0 0.0
        %648 = vmatpush.xpose.msra.mxu0 0.0
        %649 = vmatpush.xpose.msra.mxu0 0.0
        %650 = vmatpush.xpose.msra.mxu0 0.0
        %651 = vmatpush.xpose.msra.mxu0 0.0
        %652 = vmatpush.xpose.msra.mxu0 0.0
        %653 = vmatpush.xpose.msra.mxu0 0.0
        %654 = vmatpush.xpose.msra.mxu0 0.0
        %655 = vmatpush.xpose.msra.mxu0 0.0
        %656 = vmatpush.xpose.msra.mxu0 0.0
        %657 = vmatpush.xpose.msra.mxu0 0.0
        %658 = vmatpush.xpose.msra.mxu0 0.0
        %659 = vmatpush.xpose.msra.mxu0 0.0
        %660 = vmatpush.xpose.msra.mxu0 %v643
        %661 = vmatmul.f32.gmra.mxu0 %v641
        %v662 = vpop.f32.mrf.mxu0
        %v663 = vadd.f32 0.0, %v662
        %664 = vdwg.mxu0
        %v665 = vsel %vm576, %v663, -inf
        %666 = vmax.xlane.f32.xlu0 %v665
        %v667 = vpop.xlane.xlu0 %666
        %v668 = vsub.f32 %v663, %v667
        %v669 = vmul.f32 %v668, 1.442695
        %v670 = vpow.pop %v669
        %v671 = vsel %vm576, %v670, 0.0
        %672 = vadd.xlane.f32.xlu0 %v671
        %v673 = vpop.xlane.xlu0 %672
        %v674 = vrcp.pop %v673
        %676 = vrot.lane.b32.xlu0 %v575, 120
        %v677 = vpop.permute.xlu0 %676
        %v680 = vsel %vm576, %v670, 0
        %682 = vmatpush.msra.mxu0 0.0
        %683 = vmatpush.msra.mxu0 0.0
        %684 = vmatpush.msra.mxu0 0.0
        %685 = vmatpush.msra.mxu0 0.0
        %686 = vmatpush.msra.mxu0 0.0
        %687 = vmatpush.msra.mxu0 0.0
        %688 = vmatpush.msra.mxu0 0.0
        %689 = vmatpush.msra.mxu0 0.0
        %690 = vmatpush.msra.mxu0 0.0
        %691 = vmatpush.msra.mxu0 0.0
        %692 = vmatpush.msra.mxu0 0.0
        %693 = vmatpush.msra.mxu0 0.0
        %694 = vmatpush.msra.mxu0 0.0
        %695 = vmatpush.msra.mxu0 0.0
        %696 = vmatpush.msra.mxu0 0.0
        %697 = vmatpush.msra.mxu0 %v677
        %698 = vmatmul.f32.gmra.mxu0 %v680
        %v699 = vpop.f32.mrf.mxu0
        %v700 = vadd.f32 0.0, %v699
        %701 = vdwg.mxu0
        %v702 = vmul.f32 %v700, %v674
        %703 = vrot.lane.b32.xlu0 %v572, 112
        %v704 = vpop.permute.xlu0 %703
        %705 = vrot.lane.b32.xlu0 %v574, 112
        %v706 = vpop.permute.xlu0 %705
        %v707 = vsel %vm576, %v704, 0
        %v709 = vsel %vm576, %v706, 0
        %711 = vmatpush.xpose.msra.mxu0 0.0
        %712 = vmatpush.xpose.msra.mxu0 0.0
        %713 = vmatpush.xpose.msra.mxu0 0.0
        %714 = vmatpush.xpose.msra.mxu0 0.0
        %715 = vmatpush.xpose.msra.mxu0 0.0
        %716 = vmatpush.xpose.msra.mxu0 0.0
        %717 = vmatpush.xpose.msra.mxu0 0.0
        %718 = vmatpush.xpose.msra.mxu0 0.0
        %719 = vmatpush.xpose.msra.mxu0 0.0
        %720 = vmatpush.xpose.msra.mxu0 0.0
        %721 = vmatpush.xpose.msra.mxu0 0.0
        %722 = vmatpush.xpose.msra.mxu0 0.0
        %723 = vmatpush.xpose.msra.mxu0 0.0
        %724 = vmatpush.xpose.msra.mxu0 0.0
        %725 = vmatpush.xpose.msra.mxu0 0.0
        %726 = vmatpush.xpose.msra.mxu0 %v709
        %727 = vmatmul.f32.gmra.mxu0 %v707
        %v728 = vpop.f32.mrf.mxu0
        %v729 = vadd.f32 0.0, %v728
        %730 = vdwg.mxu0
        %v731 = vsel %vm576, %v729, -inf
        %732 = vmax.xlane.f32.xlu0 %v731
        %v733 = vpop.xlane.xlu0 %732
        %v734 = vsub.f32 %v729, %v733
        %v735 = vmul.f32 %v734, 1.442695
        %v736 = vpow.pop %v735
        %v737 = vsel %vm576, %v736, 0.0
        %738 = vadd.xlane.f32.xlu0 %v737
        %v739 = vpop.xlane.xlu0 %738
        %v740 = vrcp.pop %v739
        %741 = vrot.lane.b32.xlu0 %v575, 112
        %v742 = vpop.permute.xlu0 %741
        %v745 = vsel %vm576, %v736, 0
        %747 = vmatpush.msra.mxu0 0.0
        %748 = vmatpush.msra.mxu0 0.0
        %749 = vmatpush.msra.mxu0 0.0
        %750 = vmatpush.msra.mxu0 0.0
        %751 = vmatpush.msra.mxu0 0.0
        %752 = vmatpush.msra.mxu0 0.0
        %753 = vmatpush.msra.mxu0 0.0
        %754 = vmatpush.msra.mxu0 0.0
        %755 = vmatpush.msra.mxu0 0.0
        %756 = vmatpush.msra.mxu0 0.0
        %757 = vmatpush.msra.mxu0 0.0
        %758 = vmatpush.msra.mxu0 0.0
        %759 = vmatpush.msra.mxu0 0.0
        %760 = vmatpush.msra.mxu0 0.0
        %761 = vmatpush.msra.mxu0 0.0
        %762 = vmatpush.msra.mxu0 %v742
        %763 = vmatmul.f32.gmra.mxu0 %v745
        %v764 = vpop.f32.mrf.mxu0
        %v765 = vadd.f32 0.0, %v764
        %766 = vdwg.mxu0
        %v767 = vmul.f32 %v765, %v740
        %768 = vrot.lane.b32.xlu0 %v572, 104
        %v769 = vpop.permute.xlu0 %768
        %770 = vrot.lane.b32.xlu0 %v574, 104
        %v771 = vpop.permute.xlu0 %770
        %v772 = vsel %vm576, %v769, 0
        %v774 = vsel %vm576, %v771, 0
        %776 = vmatpush.xpose.msra.mxu0 0.0
        %777 = vmatpush.xpose.msra.mxu0 0.0
        %778 = vmatpush.xpose.msra.mxu0 0.0
        %779 = vmatpush.xpose.msra.mxu0 0.0
        %780 = vmatpush.xpose.msra.mxu0 0.0
        %781 = vmatpush.xpose.msra.mxu0 0.0
        %782 = vmatpush.xpose.msra.mxu0 0.0
        %783 = vmatpush.xpose.msra.mxu0 0.0
        %784 = vmatpush.xpose.msra.mxu0 0.0
        %785 = vmatpush.xpose.msra.mxu0 0.0
        %786 = vmatpush.xpose.msra.mxu0 0.0
        %787 = vmatpush.xpose.msra.mxu0 0.0
        %788 = vmatpush.xpose.msra.mxu0 0.0
        %789 = vmatpush.xpose.msra.mxu0 0.0
        %790 = vmatpush.xpose.msra.mxu0 0.0
        %791 = vmatpush.xpose.msra.mxu0 %v774
        %792 = vmatmul.f32.gmra.mxu0 %v772
        %v793 = vpop.f32.mrf.mxu0
        %v794 = vadd.f32 0.0, %v793
        %795 = vdwg.mxu0
        %v796 = vsel %vm576, %v794, -inf
        %797 = vmax.xlane.f32.xlu0 %v796
        %v798 = vpop.xlane.xlu0 %797
        %v799 = vsub.f32 %v794, %v798
        %v800 = vmul.f32 %v799, 1.442695
        %v801 = vpow.pop %v800
        %v802 = vsel %vm576, %v801, 0.0
        %803 = vadd.xlane.f32.xlu0 %v802
        %v804 = vpop.xlane.xlu0 %803
        %v805 = vrcp.pop %v804
        %806 = vrot.lane.b32.xlu0 %v575, 104
        %v807 = vpop.permute.xlu0 %806
        %v810 = vsel %vm576, %v801, 0
        %812 = vmatpush.msra.mxu0 0.0
        %813 = vmatpush.msra.mxu0 0.0
        %814 = vmatpush.msra.mxu0 0.0
        %815 = vmatpush.msra.mxu0 0.0
        %816 = vmatpush.msra.mxu0 0.0
        %817 = vmatpush.msra.mxu0 0.0
        %818 = vmatpush.msra.mxu0 0.0
        %819 = vmatpush.msra.mxu0 0.0
        %820 = vmatpush.msra.mxu0 0.0
        %821 = vmatpush.msra.mxu0 0.0
        %822 = vmatpush.msra.mxu0 0.0
        %823 = vmatpush.msra.mxu0 0.0
        %824 = vmatpush.msra.mxu0 0.0
        %825 = vmatpush.msra.mxu0 0.0
        %826 = vmatpush.msra.mxu0 0.0
        %827 = vmatpush.msra.mxu0 %v807
        %828 = vmatmul.f32.gmra.mxu0 %v810
        %v829 = vpop.f32.mrf.mxu0
        %v830 = vadd.f32 0.0, %v829
        %831 = vdwg.mxu0
        %v832 = vmul.f32 %v830, %v805
        %834 = vrot.lane.b32.xlu0 %v702, 8
        %v835 = vpop.permute.xlu0 %834
        %838 = vrot.lane.b32.xlu0 %v767, 16
        %v839 = vpop.permute.xlu0 %838
        %842 = vrot.lane.b32.xlu0 %v832, 24
        %v843 = vpop.permute.xlu0 %842
        %v845 = vsel %vm576, %v636, %v835
        %vm846 = vcmask 130048
        %v847 = vsel %vm846, %v845, %v839
        %vm848 = vcmask 195584
        %v849 = vsel %vm848, %v847, %v843
        %v850 = vld [vmem:[#allocation15] sm:$0xff]
        %v851 = vld [vmem:[#allocation15 + $0x8] sm:$0xff]
        %v852 = vld [vmem:[#allocation15 + $0x10] sm:$0xff]
        %v853 = vld [vmem:[#allocation15 + $0x18] sm:$0xff]
        %v854 = vld [vmem:[%s7] sm:$0x1]
        %v856 = vperm.slane %v854, 0
        %v859 = vsel %vm550, %v849, 0
        %861 = vmatpush.msra.mxu0 0.0
        %862 = vmatpush.msra.mxu0 0.0
        %863 = vmatpush.msra.mxu0 0.0
        %864 = vmatpush.msra.mxu0 0.0
        %865 = vmatpush.msra.mxu0 0.0
        %866 = vmatpush.msra.mxu0 0.0
        %867 = vmatpush.msra.mxu0 0.0
        %868 = vmatpush.msra.mxu0 0.0
        %869 = vmatpush.msra.mxu0 0.0
        %870 = vmatpush.msra.mxu0 0.0
        %871 = vmatpush.msra.mxu0 0.0
        %872 = vmatpush.msra.mxu0 0.0
        %873 = vmatpush.msra.mxu0 %v853
        %874 = vmatpush.msra.mxu0 %v852
        %875 = vmatpush.msra.mxu0 %v851
        %876 = vmatpush.msra.mxu0 %v850
        %877 = vmatmul.f32.gmra.mxu0 %v859
        %v878 = vpop.f32.mrf.mxu0
        %v879 = vadd.f32 %v856, %v878
        %880 = vdwg.mxu0
        %881 = vst.msk [vmem:[%s481] sm:$0xff] %vm550, %v879
        %s882 = sand.u32 %s237, 1
        %s883 = scalar_lea.sflag [#allocation6], %s882
        %s884 = sand.u32 %s237, 1
        %s885 = smul.addr %s884, 8
        %s886 = scalar_lea.vmem [#allocation16], %s885
        // Predicated region
        $region85: #{tpu_custom_call.1} parent=51 // pred_check
          %p887 = pneg %p247
        $region86: #{tpu_custom_call.1} parent=51 // pred_check_branch
          %889 = sbr.rel (%p887) target = $region88
        $region87: #{tpu_custom_call.1} parent=51 // pred_region
          %891 = vsyncadd %s883, 0
          %s892 = smul.addr %s34, 2
          %s893 = sadd.s32 %s35, %s892
          %s894 = smul.addr %s893, 8
          %s895 = scalar_lea.hbm %s8, %s894
          %s897 = sshll.u32 %s886, 4
          %s898 = int_to_ptr.vmem [resolvable:$true] %s897
          %s899 = sshll.u32 %s895, 4
          %s900 = int_to_ptr.hbm [resolvable:$true] %s899
          %902 = dma.vmem_to_hbm [thread:$0]  %s898, 128, %s900, %s883
        $region88: #{tpu_custom_call.1} parent=51 // pred_fallthru
          _
      $region52: #{tpu_custom_call.1} parent=5 // pred_fallthru
        _
      %p903 = scmp.le.s32.totalorder 2, %s25
      // Predicated region
      $region89: #{tpu_custom_call.1} parent=5 // pred_check
        %p904 = pneg %p903
      $region90: #{tpu_custom_call.1} parent=5 // pred_check_branch
        %906 = sbr.rel (%p904) target = $region92
      $region91: #{tpu_custom_call.1} parent=5 // pred_region
        %s907 = ssub.s32 %s25, 2
        // Predicated region
        $region93: #{tpu_custom_call.1} parent=91 // pred_check
          %p908 = pneg %p253
        $region94: #{tpu_custom_call.1} parent=91 // pred_check_branch
          %910 = sbr.rel (%p908) target = $region96
        $region95: #{tpu_custom_call.1} parent=91 // pred_region
          %s911 = sand.u32 %s238, 1
          %s912 = scalar_lea.sflag [#allocation6], %s911
          %s913 = sand.u32 %s238, 1
          %s914 = smul.addr %s913, 8
          %s915 = scalar_lea.vmem [#allocation16], %s914
          %917 = dma.done %s912, 128
        $region96: #{tpu_custom_call.1} parent=91 // pred_fallthru
          _
      $region92: #{tpu_custom_call.1} parent=5 // pred_fallthru
        _
    $region6: #{tpu_custom_call.1} parent=1 // loop_footer
      %s29 = sadd.s32 1, %s25
    $region7: #{tpu_custom_call.1} parent=1 // loop_footer_branch
      %24 = sbr.rel target = $region3
    $region8: #{tpu_custom_call.1} parent=1 // loop_exit
      _
    %918 = vsyncpa [#allocation5], 1
    %s919 = scalar_lea.sflag [#allocation5], 1
    %920 = vsyncpa %s919, 1
    %921 = vsyncpa [#allocation8], 1
    %s922 = scalar_lea.sflag [#allocation8], 1
    %923 = vsyncpa %s922, 1
    %924 = vsyncpa [#allocation11], 1
    %925 = vsyncpa [#allocation14], 1
    %926 = vsyncpa [#allocation6], 1
    %s927 = scalar_lea.sflag [#allocation6], 1
    %928 = vsyncpa %s927, 1

</llo_original>
